<compile_context>
chip_gen: v7x
topology: tpu7x:2x2x1
jax: 0.10.0
libtpu: 0.0.40
codegen_flags: <defaults>
</compile_context>

<pallas_src>
import functools

import jax
import jax.numpy as jnp
import numpy as np
from jax.experimental import pallas as pl
from jax.experimental.pallas import tpu as pltpu

KERNEL_SET = (2, 3, 6, 7)


# ------------------------------ Pallas kernel ------------------------------ #

def fused_temporal_conv_kernel(x_ref, w1_ref, b1_ref, w2_ref, b2_ref, out_ref,
                               *, ct):
    """Whole temporal_conv forward for a tile of (batch*node) rows.

    x_ref : (tile, cin*T)          per-row flattened input
    w1_ref: (cin*T, 2*cout*cin)    folded (conv  o  Linear1), filter|gate
    w2_ref: (2*cout*cin, 2*cout*T) block-diagonal Linear2 of both branches
    out   : (tile, cout*T)         lane-dense gated output
    """
    h = jnp.dot(x_ref[...], w1_ref[...],
                preferred_element_type=jnp.float32) + b1_ref[...]
    h = jnp.maximum(h, 0.0)
    o = jnp.dot(h, w2_ref[...],
                preferred_element_type=jnp.float32) + b2_ref[...]
    out_ref[...] = jnp.tanh(o[:, :ct]) * jax.nn.sigmoid(o[:, ct:])


# --------------------------- weight folding (host) -------------------------- #

def _pack_conv(conv_ws, conv_bs, cin):
    """Pack the 4 per-kernel conv weights into one (7*cin, cout) matrix.

    Row index = m*cin + ci where m is the dilated tap 0..6; a kernel of size k
    occupies taps m = 7-k .. 6 (matches the PyTorch right-crop x[..., -t_out:]).
    """
    full = []
    for w, k in zip(conv_ws, KERNEL_SET):
        pad = jnp.zeros(w.shape[:2] + (KERNEL_SET[-1] - k,), w.dtype)
        full.append(jnp.concatenate([pad, w], axis=-1))        # (cout_per, cin, 7)
    wcat = jnp.concatenate(full, axis=0)                        # (cout, cin, 7)
    cout = wcat.shape[0]
    wmat = wcat.transpose(2, 1, 0).reshape(KERNEL_SET[-1] * cin, cout)
    bias = jnp.concatenate(conv_bs)                             # (cout,)
    return wmat, bias


def _compose_branch(branch, cin, seq_len, dilation):
    """Fold (dilated-inception conv) o (Linear t_out->H) into one matrix, and
    build the per-channel block-diagonal second Linear."""
    wp, bc = _pack_conv(branch["conv_ws"], branch["conv_bs"], cin)   # (7*cin,cout)
    cout = wp.shape[1]
    w1, b1 = branch["w1"], branch["b1"]                          # (t_out,H),(1,H)
    w2, b2 = branch["w2"], branch["b2"]                          # (H,T),(1,T)
    t_out, H = w1.shape

    wp3 = wp.reshape(KERNEL_SET[-1], cin, cout)                  # (7, cin, cout)
    a = jnp.zeros((cin, seq_len, cout, H), jnp.float32)
    for m in range(KERNEL_SET[-1]):
        contrib = jnp.einsum('ic,tf->itcf', wp3[m], w1)          # (cin,t_out,cout,H)
        a = a.at[:, dilation * m: dilation * m + t_out].add(contrib)
    w_layer1 = a.reshape(cin * seq_len, cout * H)                # row = ci*T + tau
    b_layer1 = (bc[:, None] * w1.sum(axis=0)[None, :] + b1).reshape(1, cout * H)

    w_layer2 = jnp.kron(jnp.eye(cout, dtype=jnp.float32), w2)    # (cout*H, cout*T)
    b_layer2 = jnp.tile(b2, (1, cout))                           # (1, cout*T)
    return w_layer1, b_layer1, w_layer2, b_layer2


def _row_tile(m, max_tile=1024):
    """Row tile: multiple of 8, capped by a VMEM-safe budget, and split into
    >= 2 grid steps when possible (v7x has 2 TensorCores)."""
    mp = ((m + 7) // 8) * 8
    tile = min(max_tile, mp)
    if tile == mp and mp >= 16:
        tile = ((mp // 2 + 7) // 8) * 8
    return tile


# ------------------------------- host wrapper ------------------------------ #

def temporal_conv_forward(x, params, dilation):
    B, cin, N, T = x.shape
    cout = sum(w.shape[0] for w in params["filter"]["conv_ws"])
    H = params["filter"]["w1"].shape[1]          # MLP hidden == cin

    # ---- fold weights of both branches (tiny, traced once under jit) ----
    w1f, b1f, w2f, b2f = _compose_branch(params["filter"], cin, T, dilation)
    w1g, b1g, w2g, b2g = _compose_branch(params["gate"], cin, T, dilation)
    w1b = jnp.concatenate([w1f, w1g], axis=1)                    # (cin*T, 2*cout*H)
    b1b = jnp.concatenate([b1f, b1g], axis=1)
    zfg = jnp.zeros((w2f.shape[0], w2g.shape[1]), jnp.float32)
    zgf = jnp.zeros((w2g.shape[0], w2f.shape[1]), jnp.float32)
    w2b = jnp.block([[w2f, zfg], [zgf, w2g]])                    # (2*cout*H, 2*cout*T)
    b2b = jnp.concatenate([b2f, b2g], axis=1)

    # ---- flatten x to rows = (b, n), features = (ci, t) ----
    M = B * N
    xflat = x.transpose(0, 2, 1, 3).reshape(M, cin * T).astype(jnp.float32)

    tile = _row_tile(M)
    num_steps = pl.cdiv(M, tile)
    Mp = num_steps * tile
    if Mp != M:
        xflat = jnp.pad(xflat, ((0, Mp - M), (0, 0)))

    K1 = cin * T
    N1 = 2 * cout * H
    N2 = 2 * cout * T
    CT = cout * T

    cost = pl.CostEstimate(
        flops=2 * Mp * (K1 * N1 + N1 * N2),
        transcendentals=2 * Mp * CT,
        bytes_accessed=4 * (Mp * K1 + K1 * N1 + N1 + N1 * N2 + N2 + Mp * CT),
    )

    out_flat = pl.pallas_call(
        functools.partial(fused_temporal_conv_kernel, ct=CT),
        out_shape=jax.ShapeDtypeStruct((Mp, CT), jnp.float32),
        grid=(num_steps,),
        in_specs=[
            pl.BlockSpec((tile, K1), lambda i: (i, 0)),
            pl.BlockSpec((K1, N1), lambda i: (0, 0)),
            pl.BlockSpec((1, N1), lambda i: (0, 0)),
            pl.BlockSpec((N1, N2), lambda i: (0, 0)),
            pl.BlockSpec((1, N2), lambda i: (0, 0)),
        ],
        out_specs=pl.BlockSpec((tile, CT), lambda i: (i, 0)),
        compiler_params=pltpu.CompilerParams(
            dimension_semantics=("parallel",),
            vmem_limit_bytes=32 * 1024 * 1024),
        cost_estimate=cost,
    )(xflat, w1b, b1b, w2b, b2b)

    # rows are (b, n); per-row layout is [co, t]  ->  back to NCHW
    return out_flat[:M].reshape(B, N, cout, T).transpose(0, 2, 1, 3)


# --------------------------- parameter construction ------------------------ #

def init_branch(key, cin, cout, dilation, seq_len):
    cout_per = cout // len(KERNEL_SET)
    t_out = seq_len - dilation * (KERNEL_SET[-1] - 1)
    keys = jax.random.split(key, 2 * len(KERNEL_SET) + 4)
    conv_ws, conv_bs = [], []
    for idx, k in enumerate(KERNEL_SET):
        conv_ws.append(0.3 * jax.random.normal(
            keys[2 * idx], (cout_per, cin, k), jnp.float32))
        conv_bs.append(0.1 * jax.random.normal(
            keys[2 * idx + 1], (cout_per,), jnp.float32))
    return {
        "conv_ws": conv_ws, "conv_bs": conv_bs,
        # Linear weights stored transposed for right-multiplication.
        "w1": 0.3 * jax.random.normal(keys[-4], (t_out, cin), jnp.float32),
        "b1": 0.1 * jax.random.normal(keys[-3], (1, cin), jnp.float32),
        "w2": 0.3 * jax.random.normal(keys[-2], (cin, seq_len), jnp.float32),
        "b2": 0.1 * jax.random.normal(keys[-1], (1, seq_len), jnp.float32),
    }


# --------------------------- pure-JAX reference ---------------------------- #

def _ref_inception(x, branch, dilation):
    B, cin, N, T = x.shape
    t_out = T - dilation * (KERNEL_SET[-1] - 1)
    outs = []
    for w, b, k in zip(branch["conv_ws"], branch["conv_bs"], KERNEL_SET):
        wout = T - dilation * (k - 1)
        y = jnp.zeros((B, w.shape[0], N, wout), jnp.float32)
        for kk in range(k):
            y = y + jnp.einsum('oi,bint->bont', w[:, :, kk],
                               x[:, :, :, kk * dilation: kk * dilation + wout])
        y = y + b[None, :, None, None]
        outs.append(y[..., -t_out:])
    y = jnp.concatenate(outs, axis=1)                            # (B, cout, N, t_out)
    h = jnp.maximum(jnp.einsum('bont,tf->bonf', y, branch["w1"])
                    + branch["b1"][0], 0.0)
    return jnp.einsum('bonf,fs->bons', h, branch["w2"]) + branch["b2"][0]


def ref_forward(x, params, dilation):
    f = jnp.tanh(_ref_inception(x, params["filter"], dilation))
    g = jax.nn.sigmoid(_ref_inception(x, params["gate"], dilation))
    return f * g


# ----------------------------------- main ----------------------------------- #

if __name__ == "__main__":
    B, cin, N, seq_len = 2, 4, 8, 16
    cout = 8            # divisible by len(kernel_set)=4
    dilation = 1        # t_out = seq_len - 6*dilation = 10

    key = jax.random.PRNGKey(0)
    kx, kf, kg = jax.random.split(key, 3)
    x = jax.random.normal(kx, (B, cin, N, seq_len), jnp.float32)
    params = {
        "filter": init_branch(kf, cin, cout, dilation, seq_len),
        "gate": init_branch(kg, cin, cout, dilation, seq_len),
    }

    fwd = jax.jit(functools.partial(temporal_conv_forward, dilation=dilation))
    out = jax.block_until_ready(fwd(x, params))

    assert out.shape == (B, cout, N, seq_len), out.shape
    ref = ref_forward(x, params, dilation)
    np.testing.assert_allclose(np.asarray(out), np.asarray(ref),
                               atol=2e-2, rtol=2e-2)
    print("KERNEL_OK")
</pallas_src>

<mosaic_0001>
module attributes {stable_mosaic.version = 11 : i64} {
  func.func @fused_temporal_conv_kernel(%arg0: i32, %arg1: memref<8x64xf32, #tpu.memory_space<vmem>>, %arg2: memref<64x64xf32, #tpu.memory_space<vmem>>, %arg3: memref<1x64xf32, #tpu.memory_space<vmem>>, %arg4: memref<64x256xf32, #tpu.memory_space<vmem>>, %arg5: memref<1x256xf32, #tpu.memory_space<vmem>>, %arg6: memref<8x128xf32, #tpu.memory_space<vmem>>) attributes {dimension_semantics = [#tpu.dimension_semantics<parallel>], iteration_bounds = array<i64: 2>, scalar_prefetch = 0 : i64, scratch_operands = 0 : i64, tpu.core_type = #tpu.core_type<tc>, window_params = [{transform_indices = @transform_0, window_bounds = array<i64: 8, 64>}, {pipeline_mode = #tpu.pipeline_mode<synchronous>, transform_indices = @transform_1, window_bounds = array<i64: 64, 64>}, {pipeline_mode = #tpu.pipeline_mode<synchronous>, transform_indices = @transform_2, window_bounds = array<i64: 1, 64>}, {pipeline_mode = #tpu.pipeline_mode<synchronous>, transform_indices = @transform_3, window_bounds = array<i64: 64, 256>}, {pipeline_mode = #tpu.pipeline_mode<synchronous>, transform_indices = @transform_4, window_bounds = array<i64: 1, 256>}, {transform_indices = @transform_5, window_bounds = array<i64: 8, 128>}]} {
    %c0 = arith.constant 0 : index
    %c0_0 = arith.constant 0 : index
    %0 = vector.load %arg1[%c0, %c0_0] : memref<8x64xf32, #tpu.memory_space<vmem>>, vector<8x64xf32>
    %c0_1 = arith.constant 0 : index
    %c0_2 = arith.constant 0 : index
    %1 = vector.load %arg2[%c0_1, %c0_2] : memref<64x64xf32, #tpu.memory_space<vmem>>, vector<64x64xf32>
    %cst = arith.constant dense<0.000000e+00> : vector<8x64xf32>
    %2 = tpu.matmul %0, %1, %cst {dimension_numbers = #tpu.dot_dimension_numbers<[1], [0], [0], [1], [0, 0, 1, 1], [], []>} : vector<8x64xf32>, vector<64x64xf32>, vector<8x64xf32> -> vector<8x64xf32>
    %c0_3 = arith.constant 0 : index
    %c0_4 = arith.constant 0 : index
    %3 = vector.load %arg3[%c0_3, %c0_4] : memref<1x64xf32, #tpu.memory_space<vmem>>, vector<1x64xf32>
    %4 = vector.broadcast %3 : vector<1x64xf32> to vector<8x64xf32>
    %5 = arith.addf %2, %4 : vector<8x64xf32>
    %cst_5 = arith.constant 0.000000e+00 : f32
    %6 = vector.broadcast %cst_5 : f32 to vector<8x64xf32>
    %7 = arith.maximumf %5, %6 : vector<8x64xf32>
    %c0_6 = arith.constant 0 : index
    %c0_7 = arith.constant 0 : index
    %8 = vector.load %arg4[%c0_6, %c0_7] : memref<64x256xf32, #tpu.memory_space<vmem>>, vector<64x256xf32>
    %cst_8 = arith.constant dense<0.000000e+00> : vector<8x256xf32>
    %9 = tpu.matmul %7, %8, %cst_8 {dimension_numbers = #tpu.dot_dimension_numbers<[1], [0], [0], [1], [0, 0, 1, 1], [], []>} : vector<8x64xf32>, vector<64x256xf32>, vector<8x256xf32> -> vector<8x256xf32>
    %c0_9 = arith.constant 0 : index
    %c0_10 = arith.constant 0 : index
    %10 = vector.load %arg5[%c0_9, %c0_10] : memref<1x256xf32, #tpu.memory_space<vmem>>, vector<1x256xf32>
    %11 = vector.broadcast %10 : vector<1x256xf32> to vector<8x256xf32>
    %12 = arith.addf %9, %11 : vector<8x256xf32>
    %13 = vector.extract_strided_slice %12 {offsets = [0, 0], sizes = [8, 128], strides = [1, 1]} : vector<8x256xf32> to vector<8x128xf32>
    %14 = math.tanh %13 : vector<8x128xf32>
    %15 = vector.extract_strided_slice %12 {offsets = [0, 128], sizes = [8, 128], strides = [1, 1]} : vector<8x256xf32> to vector<8x128xf32>
    %16 = arith.negf %15 : vector<8x128xf32>
    %17 = math.exp %16 : vector<8x128xf32>
    %cst_11 = arith.constant 1.000000e+00 : f32
    %18 = vector.broadcast %cst_11 : f32 to vector<8x128xf32>
    %19 = arith.addf %18, %17 : vector<8x128xf32>
    %20 = arith.divf %18, %19 : vector<8x128xf32>
    %21 = arith.mulf %14, %20 : vector<8x128xf32>
    %c0_12 = arith.constant 0 : index
    %c0_13 = arith.constant 0 : index
    %22 = vector.load %arg6[%c0_12, %c0_13] : memref<8x128xf32, #tpu.memory_space<vmem>>, vector<8x128xf32>
    tpu.vector_store %arg6[%c0_12, %c0_13], %21 {strides = array<i32>} : memref<8x128xf32, #tpu.memory_space<vmem>>, vector<8x128xf32>,
    return
  }
  func.func @transform_0(%arg0: i32) -> (i32, i32) {
    %c0_i32 = arith.constant 0 : i32
    %c0_i32_0 = arith.constant 0 : i32
    return %arg0, %c0_i32 : i32, i32
  }
  func.func @transform_1(%arg0: i32) -> (i32, i32) {
    %c0_i32 = arith.constant 0 : i32
    %c0_i32_0 = arith.constant 0 : i32
    %c0_i32_1 = arith.constant 0 : i32
    return %c0_i32, %c0_i32_0 : i32, i32
  }
  func.func @transform_2(%arg0: i32) -> (i32, i32) {
    %c0_i32 = arith.constant 0 : i32
    %c0_i32_0 = arith.constant 0 : i32
    %c0_i32_1 = arith.constant 0 : i32
    return %c0_i32, %c0_i32_0 : i32, i32
  }
  func.func @transform_3(%arg0: i32) -> (i32, i32) {
    %c0_i32 = arith.constant 0 : i32
    %c0_i32_0 = arith.constant 0 : i32
    %c0_i32_1 = arith.constant 0 : i32
    return %c0_i32, %c0_i32_0 : i32, i32
  }
  func.func @transform_4(%arg0: i32) -> (i32, i32) {
    %c0_i32 = arith.constant 0 : i32
    %c0_i32_0 = arith.constant 0 : i32
    %c0_i32_1 = arith.constant 0 : i32
    return %c0_i32, %c0_i32_0 : i32, i32
  }
  func.func @transform_5(%arg0: i32) -> (i32, i32) {
    %c0_i32 = arith.constant 0 : i32
    %c0_i32_0 = arith.constant 0 : i32
    return %arg0, %c0_i32 : i32, i32
  }
}

</mosaic_0001>

<llo_original>
// kernel: temporal_conv_forward.1
$region0: #{temporal_conv_forward.1}
  #allocation0 [shape = 'u32[]', space=smem, size = 0x4, offset = 0x4, fixed_abs, tag = 'smem constant byte address 0x4 - core index']
  #allocation1 [shape = 'u32[144,128]{1,0:T(1,128)}', space=vmem, size = 0x12000, scoped, tag = 'internal scratch']
  %s0 = inlined_call_operand.vmem [shape: f32[16,64], index: 0, kind: input, shape index: {}]
  %s1 = inlined_call_operand.vmem [shape: f32[64,64], index: 1, kind: input, shape index: {}]
  %s2 = inlined_call_operand.vmem [shape: f32[1,64], index: 2, kind: input, shape index: {}]
  %s3 = inlined_call_operand.vmem [shape: f32[64,256], index: 3, kind: input, shape index: {}]
  %s4 = inlined_call_operand.vmem [shape: f32[1,256], index: 4, kind: input, shape index: {}]
  %s5 = inlined_call_operand.vmem [shape: f32[16,128], index: 5, kind: output, shape index: {}]
  %s6 = sld [smem:[#allocation0]]
  $region53: #{temporal_conv_forward.1} parent=0
    _
  %s8 = ssub.s32 1, %s6
  %s9 = scalar_select 0, %s8, %s6
  loop: start=0, step=1, limit=4
  $region2: #{temporal_conv_forward.1} parent=0 // loop_pre_header
    _
  $region3: #{temporal_conv_forward.1} parent=0 // loop_header
    %s11 = sphi 0, %s15
    %p12 = scmp.ge.s32.totalorder %s11, 4
    %s21 = sphi 0, %s23
    %s24 = sphi 0, %s21
    %s25 = sphi 0, %s24
    %s41 = sphi 0, %s25
    %s45 = sphi 0, %s45
    %s47 = sphi 0, %s45
    %s48 = sphi 0, %s47
    %s62 = sphi 0, %s48
    %s66 = sphi 0, %s66
    %s68 = sphi 0, %s66
    %s69 = sphi 0, %s68
    %s83 = sphi 0, %s69
    %s87 = sphi 0, %s87
    %s89 = sphi 0, %s87
    %s90 = sphi 0, %s89
    %s104 = sphi 0, %s90
    %s108 = sphi 0, %s108
    %s110 = sphi 0, %s108
    %s111 = sphi 0, %s110
    %s125 = sphi 0, %s111
    %s131 = sphi 0, %s133
    %s134 = sphi 0, %s131
    %s135 = sphi 0, %s134
    %s151 = sphi 0, %s135
  $region4: #{temporal_conv_forward.1} parent=0 // loop_header_branch
    %14 = sbr.rel (%p12) target = $region8
  $region5: #{temporal_conv_forward.1} parent=0 // loop_body
    %s16 = ssub.s32 %s11, 1
    %s17 = ssub.s32 %s11, 2
    %s18 = sadd.s32 %s11, 1
    %s19 = ssub.s32 %s11, %s18
    %p20 = scmp.eq.s32.totalorder %s19, 0
    %s22 = sadd.s32 %s21, 1
    %s23 = scalar_select %p20, %s21, %s22
    %p26 = pneg %p20
    %p27 = scmp.eq.s32.totalorder %s11, 1
    %p28 = por %p26, %p27
    %p29 = scmp.ne.s32.totalorder %s21, %s24
    %p30 = scmp.eq.s32.totalorder %s11, 0
    %p31 = por %p29, %p30
    %p32 = scmp.ne.s32.totalorder %s21, %s24
    %p33 = scmp.eq.s32.totalorder %s16, 1
    %p34 = por %p32, %p33
    %p35 = scmp.ne.s32.totalorder %s24, %s25
    %p36 = scmp.eq.s32.totalorder %s16, 0
    %p37 = por %p35, %p36
    %p38 = scmp.ne.s32.totalorder %s24, %s25
    %p39 = scmp.eq.s32.totalorder %s17, 1
    %p40 = por %p38, %p39
    %p42 = scmp.ne.s32.totalorder %s25, %s41
    %p43 = scmp.eq.s32.totalorder %s17, 0
    %p44 = por %p42, %p43
    %s46 = sadd.s32 %s45, 1
    %p49 = scmp.eq.s32.totalorder %s11, 1
    %p50 = scmp.ne.s32.totalorder %s45, %s47
    %p51 = scmp.eq.s32.totalorder %s11, 0
    %p52 = por %p50, %p51
    %p53 = scmp.ne.s32.totalorder %s45, %s47
    %p54 = scmp.eq.s32.totalorder %s16, 1
    %p55 = por %p53, %p54
    %p56 = scmp.ne.s32.totalorder %s47, %s48
    %p57 = scmp.eq.s32.totalorder %s16, 0
    %p58 = por %p56, %p57
    %p59 = scmp.ne.s32.totalorder %s47, %s48
    %p60 = scmp.eq.s32.totalorder %s17, 1
    %p61 = por %p59, %p60
    %p63 = scmp.ne.s32.totalorder %s48, %s62
    %p64 = scmp.eq.s32.totalorder %s17, 0
    %p65 = por %p63, %p64
    %s67 = sadd.s32 %s66, 1
    %p70 = scmp.eq.s32.totalorder %s11, 1
    %p71 = scmp.ne.s32.totalorder %s66, %s68
    %p72 = scmp.eq.s32.totalorder %s11, 0
    %p73 = por %p71, %p72
    %p74 = scmp.ne.s32.totalorder %s66, %s68
    %p75 = scmp.eq.s32.totalorder %s16, 1
    %p76 = por %p74, %p75
    %p77 = scmp.ne.s32.totalorder %s68, %s69
    %p78 = scmp.eq.s32.totalorder %s16, 0
    %p79 = por %p77, %p78
    %p80 = scmp.ne.s32.totalorder %s68, %s69
    %p81 = scmp.eq.s32.totalorder %s17, 1
    %p82 = por %p80, %p81
    %p84 = scmp.ne.s32.totalorder %s69, %s83
    %p85 = scmp.eq.s32.totalorder %s17, 0
    %p86 = por %p84, %p85
    %s88 = sadd.s32 %s87, 1
    %p91 = scmp.eq.s32.totalorder %s11, 1
    %p92 = scmp.ne.s32.totalorder %s87, %s89
    %p93 = scmp.eq.s32.totalorder %s11, 0
    %p94 = por %p92, %p93
    %p95 = scmp.ne.s32.totalorder %s87, %s89
    %p96 = scmp.eq.s32.totalorder %s16, 1
    %p97 = por %p95, %p96
    %p98 = scmp.ne.s32.totalorder %s89, %s90
    %p99 = scmp.eq.s32.totalorder %s16, 0
    %p100 = por %p98, %p99
    %p101 = scmp.ne.s32.totalorder %s89, %s90
    %p102 = scmp.eq.s32.totalorder %s17, 1
    %p103 = por %p101, %p102
    %p105 = scmp.ne.s32.totalorder %s90, %s104
    %p106 = scmp.eq.s32.totalorder %s17, 0
    %p107 = por %p105, %p106
    %s109 = sadd.s32 %s108, 1
    %p112 = scmp.eq.s32.totalorder %s11, 1
    %p113 = scmp.ne.s32.totalorder %s108, %s110
    %p114 = scmp.eq.s32.totalorder %s11, 0
    %p115 = por %p113, %p114
    %p116 = scmp.ne.s32.totalorder %s108, %s110
    %p117 = scmp.eq.s32.totalorder %s16, 1
    %p118 = por %p116, %p117
    %p119 = scmp.ne.s32.totalorder %s110, %s111
    %p120 = scmp.eq.s32.totalorder %s16, 0
    %p121 = por %p119, %p120
    %p122 = scmp.ne.s32.totalorder %s110, %s111
    %p123 = scmp.eq.s32.totalorder %s17, 1
    %p124 = por %p122, %p123
    %p126 = scmp.ne.s32.totalorder %s111, %s125
    %p127 = scmp.eq.s32.totalorder %s17, 0
    %p128 = por %p126, %p127
    %s129 = ssub.s32 %s11, %s18
    %p130 = scmp.eq.s32.totalorder %s129, 0
    %s132 = sadd.s32 %s131, 1
    %s133 = scalar_select %p130, %s131, %s132
    %p136 = pneg %p130
    %p137 = scmp.eq.s32.totalorder %s11, 1
    %p138 = por %p136, %p137
    %p139 = scmp.ne.s32.totalorder %s131, %s134
    %p140 = scmp.eq.s32.totalorder %s11, 0
    %p141 = por %p139, %p140
    %p142 = scmp.ne.s32.totalorder %s131, %s134
    %p143 = scmp.eq.s32.totalorder %s16, 1
    %p144 = por %p142, %p143
    %p145 = scmp.ne.s32.totalorder %s134, %s135
    %p146 = scmp.eq.s32.totalorder %s16, 0
    %p147 = por %p145, %p146
    %p148 = scmp.ne.s32.totalorder %s134, %s135
    %p149 = scmp.eq.s32.totalorder %s17, 1
    %p150 = por %p148, %p149
    %p152 = scmp.ne.s32.totalorder %s135, %s151
    %p153 = scmp.eq.s32.totalorder %s17, 0
    %p154 = por %p152, %p153
    %p155 = scmp.le.s32.totalorder 1, %s11
    %p156 = scmp.lt.s32.totalorder %s11, 3
    %p157 = pnand %p155, %p156
    %p158 = pneg %p157
    // Predicated region
    $region9: #{temporal_conv_forward.1} parent=5 // pred_check
      _
    $region10: #{temporal_conv_forward.1} parent=5 // pred_check_branch
      %160 = sbr.rel (%p157) target = $region12
    $region11: #{temporal_conv_forward.1} parent=5 // pred_region
      %s161 = ssub.s32 %s11, 1
      // Predicated region
      $region13: #{temporal_conv_forward.1} parent=11 // pred_check
        %p162 = pneg %p58
      $region14: #{temporal_conv_forward.1} parent=11 // pred_check_branch
        %164 = sbr.rel (%p162) target = $region16
      $region15: #{temporal_conv_forward.1} parent=11 // pred_region
        _
      $region16: #{temporal_conv_forward.1} parent=11 // pred_fallthru
        _
      // Predicated region
      $region17: #{temporal_conv_forward.1} parent=11 // pred_check
        %p165 = pneg %p79
      $region18: #{temporal_conv_forward.1} parent=11 // pred_check_branch
        %167 = sbr.rel (%p165) target = $region20
      $region19: #{temporal_conv_forward.1} parent=11 // pred_region
        _
      $region20: #{temporal_conv_forward.1} parent=11 // pred_fallthru
        _
      // Predicated region
      $region21: #{temporal_conv_forward.1} parent=11 // pred_check
        %p168 = pneg %p100
      $region22: #{temporal_conv_forward.1} parent=11 // pred_check_branch
        %170 = sbr.rel (%p168) target = $region24
      $region23: #{temporal_conv_forward.1} parent=11 // pred_region
        _
      $region24: #{temporal_conv_forward.1} parent=11 // pred_fallthru
        _
      // Predicated region
      $region25: #{temporal_conv_forward.1} parent=11 // pred_check
        %p171 = pneg %p121
      $region26: #{temporal_conv_forward.1} parent=11 // pred_check_branch
        %173 = sbr.rel (%p171) target = $region28
      $region27: #{temporal_conv_forward.1} parent=11 // pred_region
        _
      $region28: #{temporal_conv_forward.1} parent=11 // pred_fallthru
        _
    $region12: #{temporal_conv_forward.1} parent=5 // pred_fallthru
      _
    %p174 = scmp.lt.s32.totalorder %s11, 2
    // Predicated region
    $region29: #{temporal_conv_forward.1} parent=5 // pred_check
      %p175 = pneg %p174
    $region30: #{temporal_conv_forward.1} parent=5 // pred_check_branch
      %177 = sbr.rel (%p175) target = $region32
    $region31: #{temporal_conv_forward.1} parent=5 // pred_region
      // Predicated region
      $region33: #{temporal_conv_forward.1} parent=31 // pred_check
        %p178 = pneg %p31
      $region34: #{temporal_conv_forward.1} parent=31 // pred_check_branch
        %180 = sbr.rel (%p178) target = $region36
      $region35: #{temporal_conv_forward.1} parent=31 // pred_region
        %p181 = scmp.lt.s32.totalorder %s11, 1
        %s182 = scalar_select %p181, %s11, 1
        %s183 = smul.addr %s182, 8
        %s184 = scalar_lea.vmem %s0, %s183
      $region36: #{temporal_conv_forward.1} parent=31 // pred_fallthru
        _
    $region32: #{temporal_conv_forward.1} parent=5 // pred_fallthru
      _
    %p185 = scmp.le.s32.totalorder 1, %s11
    %p186 = scmp.lt.s32.totalorder %s11, 3
    %p187 = pnand %p185, %p186
    %p188 = pneg %p187
    // Predicated region
    $region37: #{temporal_conv_forward.1} parent=5 // pred_check
      _
    $region38: #{temporal_conv_forward.1} parent=5 // pred_check_branch
      %190 = sbr.rel (%p187) target = $region40
    $region39: #{temporal_conv_forward.1} parent=5 // pred_region
      %s191 = ssub.s32 %s11, 1
      %p192 = scmp.lt.s32.totalorder %s16, 1
      %s193 = scalar_select %p192, %s16, 1
      %s194 = smul.addr %s193, 8
      %s195 = scalar_lea.vmem %s0, %s194
      %p196 = pneg %p37
      %p197 = pneg %p34
      %p198 = pneg %p58
      %p199 = pneg %p55
      %p200 = pneg %p79
      %p201 = pneg %p76
      %p202 = pneg %p100
      %p203 = pneg %p97
      %p204 = pneg %p121
      %p205 = pneg %p118
      %p206 = pneg %p147
      %p207 = pneg %p144
      %p208 = scmp.lt.s32.totalorder %s16, 1
      %s209 = scalar_select %p208, %s16, 1
      %s210 = smul.addr %s209, 8
      %s211 = scalar_lea.vmem %s5, %s210
      %p212 = scmp.lt.s32.totalorder %s16, 1
      %s213 = scalar_select %p212, %s16, 1
      %s214 = smul.addr %s213, 8
      %s215 = scalar_lea.vmem %s0, %s214
      %p216 = scmp.lt.s32.totalorder %s16, 1
      %s217 = scalar_select %p216, %s16, 1
      %s218 = smul.addr %s217, 8
      %s219 = scalar_lea.vmem %s5, %s218
      %v220 = vld [vmem:[%s215] sm:$0xff]
      %v221 = vld [vmem:[%s1] sm:$0xff]
      %v222 = vld [vmem:[%s1 + $0x8] sm:$0xff]
      %v223 = vld [vmem:[%s1 + $0x10] sm:$0xff]
      %v224 = vld [vmem:[%s1 + $0x18] sm:$0xff]
      %v225 = vld [vmem:[%s1 + $0x20] sm:$0xff]
      %v226 = vld [vmem:[%s1 + $0x28] sm:$0xff]
      %v227 = vld [vmem:[%s1 + $0x30] sm:$0xff]
      %v228 = vld [vmem:[%s1 + $0x38] sm:$0xff]
      %v229 = vld [vmem:[%s2] sm:$0x1]
      %v231 = vlaneseq
      %v232 = vshrl.u32 %v231, 7
      %v233 = vsub.s32 0, %v232
      %v234 = vrot.slane %v229, %v233
      %vm236 = vcmask 523264
      %v238 = vsel %vm236, %v220, 0
      %240 = vmatprep.subr.mxu0 0.0
      %241 = vmatpush1.msra.mxu0 %v221
      %242 = vmatprep.subr.mxu0 0.0
      %243 = vmatpush1.msra.mxu0 %v222
      %244 = vmatprep.subr.mxu0 0.0
      %245 = vmatpush1.msra.mxu0 %v223
      %246 = vmatprep.subr.mxu0 0.0
      %247 = vmatpush1.msra.mxu0 %v224
      %248 = vmatprep.subr.mxu0 0.0
      %249 = vmatpush1.msra.mxu0 %v225
      %250 = vmatprep.subr.mxu0 0.0
      %251 = vmatpush1.msra.mxu0 %v226
      %252 = vmatprep.subr.mxu0 0.0
      %253 = vmatpush1.msra.mxu0 %v227
      %254 = vmatprep.subr.mxu0 0.0
      %255 = vmatpush1.msra.mxu0 %v228
      %256 = vmatprep.subr.mxu0 0.0
      %257 = vmatpush1.msra.mxu0 0.0
      %258 = vmatprep.subr.mxu0 0.0
      %259 = vmatpush1.msra.mxu0 0.0
      %260 = vmatprep.subr.mxu0 0.0
      %261 = vmatpush1.msra.mxu0 0.0
      %262 = vmatprep.subr.mxu0 0.0
      %263 = vmatpush1.msra.mxu0 0.0
      %264 = vmatprep.subr.mxu0 0.0
      %265 = vmatpush1.msra.mxu0 0.0
      %266 = vmatprep.subr.mxu0 0.0
      %267 = vmatpush1.msra.mxu0 0.0
      %268 = vmatprep.subr.mxu0 0.0
      %269 = vmatpush1.msra.mxu0 0.0
      %270 = vmatprep.subr.mxu0 0.0
      %271 = vmatpush1.msra.mxu0 0.0
      %272 = vmatprep.subr.mxu0 0.0
      %273 = vmatpush1.msra.mxu0 0.0
      %274 = vmatprep.subr.mxu0 0.0
      %275 = vmatpush1.msra.mxu0 0.0
      %276 = vmatprep.subr.mxu0 0.0
      %277 = vmatpush1.msra.mxu0 0.0
      %278 = vmatprep.subr.mxu0 0.0
      %279 = vmatpush1.msra.mxu0 0.0
      %280 = vmatprep.subr.mxu0 0.0
      %281 = vmatpush1.msra.mxu0 0.0
      %282 = vmatprep.subr.mxu0 0.0
      %283 = vmatpush1.msra.mxu0 0.0
      %284 = vmatprep.subr.mxu0 0.0
      %285 = vmatpush1.msra.mxu0 0.0
      %286 = vmatprep.subr.mxu0 0.0
      %287 = vmatpush1.msra.mxu0 0.0
      %288 = vmatprep.subr.mxu0 0.0
      %289 = vmatpush1.msra.mxu0 0.0
      %290 = vmatprep.subr.mxu0 0.0
      %291 = vmatpush1.msra.mxu0 0.0
      %292 = vmatprep.subr.mxu0 0.0
      %293 = vmatpush1.msra.mxu0 0.0
      %294 = vmatprep.subr.mxu0 0.0
      %295 = vmatpush1.msra.mxu0 0.0
      %296 = vmatprep.subr.mxu0 0.0
      %297 = vmatpush1.msra.mxu0 0.0
      %298 = vmatprep.subr.mxu0 0.0
      %299 = vmatpush1.msra.mxu0 0.0
      %300 = vmatprep.subr.mxu0 0.0
      %301 = vmatpush1.msra.mxu0 0.0
      %302 = vmatprep.subr.mxu0 0.0
      %303 = vmatpush1.msra.mxu0 0.0
      %304 = vmatprep.mubr.f32.mxu0 0.0
      %305 = vmatmul.mubr.f32.gmra.mrb[0].mxu0 %v238
      %v306 = vpop.f32.mrb[0].mxu0
      %v307 = vadd.f32 %v234, %v306
      %v308 = vpop.f32.mrb[0].mxu0
      %309 = vdwg.mxu0
      %v310 = vmax.f32 %v307, 0.0
      %v311 = vld [vmem:[%s3] sm:$0xff]
      %v312 = vld [vmem:[%s3 + $0x8] sm:$0xff]
      %v313 = vld [vmem:[%s3 + $0x10] sm:$0xff]
      %v314 = vld [vmem:[%s3 + $0x18] sm:$0xff]
      %v315 = vld [vmem:[%s3 + $0x20] sm:$0xff]
      %v316 = vld [vmem:[%s3 + $0x28] sm:$0xff]
      %v317 = vld [vmem:[%s3 + $0x30] sm:$0xff]
      %v318 = vld [vmem:[%s3 + $0x38] sm:$0xff]
      %v319 = vld [vmem:[%s3 + $0x40] sm:$0xff]
      %v320 = vld [vmem:[%s3 + $0x48] sm:$0xff]
      %v321 = vld [vmem:[%s3 + $0x50] sm:$0xff]
      %v322 = vld [vmem:[%s3 + $0x58] sm:$0xff]
      %v323 = vld [vmem:[%s3 + $0x60] sm:$0xff]
      %v324 = vld [vmem:[%s3 + $0x68] sm:$0xff]
      %v325 = vld [vmem:[%s3 + $0x70] sm:$0xff]
      %v326 = vld [vmem:[%s3 + $0x78] sm:$0xff]
      %v327 = vld [vmem:[%s4] sm:$0x3]
      %v329 = vlaneseq
      %v330 = vshrl.u32 %v329, 7
      %v331 = vsub.s32 0, %v330
      %v332 = vrot.slane %v327, %v331
      %v333 = vlaneseq
      %v334 = vshrl.u32 %v333, 7
      %v335 = vsub.s32 1, %v334
      %v336 = vrot.slane %v327, %v335
      %v340 = vsel %vm236, %v310, 0
      %342 = vmatprep.subr.mxu0 %v312
      %343 = vmatpush1.msra.mxu0 %v311
      %344 = vmatprep.subr.mxu0 %v314
      %345 = vmatpush1.msra.mxu0 %v313
      %346 = vmatprep.subr.mxu0 %v316
      %347 = vmatpush1.msra.mxu0 %v315
      %348 = vmatprep.subr.mxu0 %v318
      %349 = vmatpush1.msra.mxu0 %v317
      %350 = vmatprep.subr.mxu0 %v320
      %351 = vmatpush1.msra.mxu0 %v319
      %352 = vmatprep.subr.mxu0 %v322
      %353 = vmatpush1.msra.mxu0 %v321
      %354 = vmatprep.subr.mxu0 %v324
      %355 = vmatpush1.msra.mxu0 %v323
      %356 = vmatprep.subr.mxu0 %v326
      %357 = vmatpush1.msra.mxu0 %v325
      %358 = vmatprep.subr.mxu0 0.0
      %359 = vmatpush1.msra.mxu0 0.0
      %360 = vmatprep.subr.mxu0 0.0
      %361 = vmatpush1.msra.mxu0 0.0
      %362 = vmatprep.subr.mxu0 0.0
      %363 = vmatpush1.msra.mxu0 0.0
      %364 = vmatprep.subr.mxu0 0.0
      %365 = vmatpush1.msra.mxu0 0.0
      %366 = vmatprep.subr.mxu0 0.0
      %367 = vmatpush1.msra.mxu0 0.0
      %368 = vmatprep.subr.mxu0 0.0
      %369 = vmatpush1.msra.mxu0 0.0
      %370 = vmatprep.subr.mxu0 0.0
      %371 = vmatpush1.msra.mxu0 0.0
      %372 = vmatprep.subr.mxu0 0.0
      %373 = vmatpush1.msra.mxu0 0.0
      %374 = vmatprep.subr.mxu0 0.0
      %375 = vmatpush1.msra.mxu0 0.0
      %376 = vmatprep.subr.mxu0 0.0
      %377 = vmatpush1.msra.mxu0 0.0
      %378 = vmatprep.subr.mxu0 0.0
      %379 = vmatpush1.msra.mxu0 0.0
      %380 = vmatprep.subr.mxu0 0.0
      %381 = vmatpush1.msra.mxu0 0.0
      %382 = vmatprep.subr.mxu0 0.0
      %383 = vmatpush1.msra.mxu0 0.0
      %384 = vmatprep.subr.mxu0 0.0
      %385 = vmatpush1.msra.mxu0 0.0
      %386 = vmatprep.subr.mxu0 0.0
      %387 = vmatpush1.msra.mxu0 0.0
      %388 = vmatprep.subr.mxu0 0.0
      %389 = vmatpush1.msra.mxu0 0.0
      %390 = vmatprep.subr.mxu0 0.0
      %391 = vmatpush1.msra.mxu0 0.0
      %392 = vmatprep.subr.mxu0 0.0
      %393 = vmatpush1.msra.mxu0 0.0
      %394 = vmatprep.subr.mxu0 0.0
      %395 = vmatpush1.msra.mxu0 0.0
      %396 = vmatprep.subr.mxu0 0.0
      %397 = vmatpush1.msra.mxu0 0.0
      %398 = vmatprep.subr.mxu0 0.0
      %399 = vmatpush1.msra.mxu0 0.0
      %400 = vmatprep.subr.mxu0 0.0
      %401 = vmatpush1.msra.mxu0 0.0
      %402 = vmatprep.subr.mxu0 0.0
      %403 = vmatpush1.msra.mxu0 0.0
      %404 = vmatprep.subr.mxu0 0.0
      %405 = vmatpush1.msra.mxu0 0.0
      %406 = vmatprep.mubr.f32.mxu0 0.0
      %407 = vmatmul.mubr.f32.gmra.mrb[0].mxu0 %v340
      %v408 = vpop.f32.mrb[0].mxu0
      %v409 = vadd.f32 %v332, %v408
      %v410 = vpop.f32.mrb[0].mxu0
      %v411 = vadd.f32 %v336, %v410
      %412 = vdwg.mxu0
      %v413 = vtanh.pop %v409
      %v414 = vxor.u32 %v411, 2147483648
      %v415 = vmul.f32 %v414, 1.442695
      %v416 = vpow.pop %v415
      %v417 = vadd.f32 %v416, 1.0
      %v418 = vrcp.pop %v417
      %v419 = vmul.f32 1.0, %v418
      %v420 = vmul.f32 %v413, %v419
      %421 = vst [vmem:[%s219] sm:$0xff] %v420
      %p422 = scmp.lt.s32.totalorder %s16, 1
      %s423 = scalar_select %p422, %s16, 1
      %s424 = smul.addr %s423, 8
      %s425 = scalar_lea.vmem %s5, %s424
      // Predicated region
      $region41: #{temporal_conv_forward.1} parent=39 // pred_check
        %p426 = pneg %p144
      $region42: #{temporal_conv_forward.1} parent=39 // pred_check_branch
        %428 = sbr.rel (%p426) target = $region44
      $region43: #{temporal_conv_forward.1} parent=39 // pred_region
        _
      $region44: #{temporal_conv_forward.1} parent=39 // pred_fallthru
        _
    $region40: #{temporal_conv_forward.1} parent=5 // pred_fallthru
      _
    %p429 = scmp.le.s32.totalorder 2, %s11
    // Predicated region
    $region45: #{temporal_conv_forward.1} parent=5 // pred_check
      %p430 = pneg %p429
    $region46: #{temporal_conv_forward.1} parent=5 // pred_check_branch
      %432 = sbr.rel (%p430) target = $region48
    $region47: #{temporal_conv_forward.1} parent=5 // pred_region
      %s433 = ssub.s32 %s11, 2
      // Predicated region
      $region49: #{temporal_conv_forward.1} parent=47 // pred_check
        %p434 = pneg %p150
      $region50: #{temporal_conv_forward.1} parent=47 // pred_check_branch
        %436 = sbr.rel (%p434) target = $region52
      $region51: #{temporal_conv_forward.1} parent=47 // pred_region
        %p437 = scmp.lt.s32.totalorder %s17, 1
        %s438 = scalar_select %p437, %s17, 1
        %s439 = smul.addr %s438, 8
        %s440 = scalar_lea.vmem %s5, %s439
      $region52: #{temporal_conv_forward.1} parent=47 // pred_fallthru
        _
    $region48: #{temporal_conv_forward.1} parent=5 // pred_fallthru
      _
  $region6: #{temporal_conv_forward.1} parent=0 // loop_footer
    %s15 = sadd.s32 1, %s11
  $region7: #{temporal_conv_forward.1} parent=0 // loop_footer_branch
    %10 = sbr.rel target = $region3
  $region8: #{temporal_conv_forward.1} parent=0 // loop_exit
    _

</llo_original>
